<compile_context>
chip_gen: v6e
topology: v6e:2x2x1
jax: 0.10.0
libtpu: 0.0.40
codegen_flags: <defaults>
</compile_context>

<pallas_src>
import functools

import jax
import jax.numpy as jnp
from jax.experimental import pallas as pl
from jax.experimental.pallas import tpu as pltpu


def _basic_block_kernel(x_ref, w1_ref, b1_ref, w2_ref, b2_ref, mask_ref, o_ref,
                        *, Wp, E, L_out):
    # x_ref:    (1, Cin, L_in)   folded, spatially padded, lane-extended input, f32
    #                            (L_in = L_out + 2E, E = Wp + 1)
    # w*_ref:   (Cout, 9*C)      conv weights with BN scale folded, bf16;
    #                            column d*C + i <-> tap d = ky*3+kx, in-channel i
    # b*_ref:   (Cout, 1)        folded BN bias, f32
    # mask_ref: (1, L_out)       1.0 on interior image lanes, 0.0 on border/gap lanes
    # o_ref:    (1, Cout, L_out) output over the padded/folded lane domain
    cout = o_ref.shape[1]
    offs = tuple(ky * Wp + kx for ky in range(3) for kx in range(3))  # 0 .. 2*Wp+2

    x = x_ref[0]                                  # (Cin, L_in) f32
    x_bf = x.astype(jnp.bfloat16)                 # single up-front cast (not per tap)

    # ---- conv1 + bn1 + relu: one big-K MXU matmul -------------------------------
    # Tap d of output lane q reads lane q + offs[d] (pure contiguous lane slices).
    patch1 = jnp.concatenate([x_bf[:, o:o + L_out] for o in offs], axis=0)   # (9*Cin, L_out)
    h = jnp.dot(w1_ref[...], patch1, preferred_element_type=jnp.float32)     # (Cout, L_out)
    h = jnp.maximum(h + b1_ref[...], 0.0) * mask_ref[...]  # bias+relu, zero non-interior lanes

    # ---- conv2 input: bf16, re-extended in registers (no VMEM round trip) -------
    zpad = jnp.zeros((cout, E), dtype=jnp.bfloat16)
    h_ext = jnp.concatenate([zpad, h.astype(jnp.bfloat16), zpad], axis=1)    # (Cout, L_out+2E)

    # ---- conv2 + bn2 -------------------------------------------------------------
    patch2 = jnp.concatenate([h_ext[:, o:o + L_out] for o in offs], axis=0)  # (9*Cout, L_out)
    out = jnp.dot(w2_ref[...], patch2, preferred_element_type=jnp.float32)   # (Cout, L_out)
    out = out + b2_ref[...]

    # ---- identity residual (f32) + relu ------------------------------------------
    residual = x[:, E:E + L_out]                  # Cin == Cout here
    o_ref[0] = jnp.maximum(out + residual, 0.0).astype(o_ref.dtype)


def basic_block_pallas(x_nchw, w1, bn1, w2, bn2, eps=1e-5, num_groups=1):
    """Fused BasicBlock forward. x_nchw: (B, Cin, H, W) float32."""
    B, Cin, H, W = x_nchw.shape
    Cout = w1.shape[0]
    assert Cin == Cout, "identity residual requires in_planes == planes"
    # TODO(synk): stride>1 / downsample residual path not implemented.
    assert B % num_groups == 0
    G = num_groups
    Bg = B // G

    Hp, Wp = H + 2, W + 2
    N = Hp * Wp            # lanes of one zero-padded image (row-major)
    E = Wp + 1             # lane extension: one padded row + one pixel
    S = N + 2 * E          # per-image segment length along the folded lane axis
    L_out = Bg * S         # output lanes per grid step (whole batch group folded)
    L_in = L_out + 2 * E   # input lanes per grid step (extra zeros for tap shifts)

    g1, be1, m1, v1 = bn1
    g2, be2, m2, v2 = bn2
    s1 = g1 / jnp.sqrt(v1 + eps)
    s2 = g2 / jnp.sqrt(v2 + eps)
    b1 = (be1 - m1 * s1).reshape(Cout, 1).astype(jnp.float32)
    b2 = (be2 - m2 * s2).reshape(Cout, 1).astype(jnp.float32)

    # Fold BN scale into the conv weights; reorder OIHW -> (Cout, tap-major 9*Cin); bf16.
    def prep_w(w, s):
        w = w * s[:, None, None, None]
        return jnp.transpose(w, (0, 2, 3, 1)).reshape(w.shape[0], -1).astype(jnp.bfloat16)

    w1_mat = prep_w(w1, s1)    # (Cout, 9*Cin)
    w2_mat = prep_w(w2, s2)    # (Cout, 9*Cout)

    # Folded input: per image  [E zeros | padded image flat (N) | E zeros],
    # segments concatenated over the Bg images of a group, plus 2E trailing zeros.
    x_pad = jnp.pad(x_nchw, ((0, 0), (0, 0), (1, 1), (1, 1)))               # (B,C,Hp,Wp)
    seg = jnp.pad(x_pad.reshape(B, Cin, N), ((0, 0), (0, 0), (E, E)))       # (B,C,S)
    x_folded = seg.reshape(G, Bg, Cin, S).transpose(0, 2, 1, 3).reshape(G, Cin, Bg * S)
    x_folded = jnp.pad(x_folded, ((0, 0), (0, 0), (0, 2 * E)))              # (G,C,L_in)

    # Interior mask over the output lane domain (zero at padded borders & gaps).
    m2d = jnp.zeros((Hp, Wp), jnp.float32).at[1:-1, 1:-1].set(1.0)
    m_seg = jnp.concatenate([m2d.reshape(-1), jnp.zeros((2 * E,), jnp.float32)])
    mask = jnp.tile(m_seg, Bg).reshape(1, L_out)

    kernel = functools.partial(_basic_block_kernel, Wp=Wp, E=E, L_out=L_out)

    out_folded = pl.pallas_call(
        kernel,
        out_shape=jax.ShapeDtypeStruct((G, Cout, L_out), jnp.float32),
        grid_spec=pltpu.PrefetchScalarGridSpec(
            num_scalar_prefetch=0,
            grid=(G,),
            in_specs=[
                pl.BlockSpec((1, Cin, L_in), lambda g: (g, 0, 0)),
                pl.BlockSpec((Cout, 9 * Cin), lambda g: (0, 0)),
                pl.BlockSpec((Cout, 1), lambda g: (0, 0)),
                pl.BlockSpec((Cout, 9 * Cout), lambda g: (0, 0)),
                pl.BlockSpec((Cout, 1), lambda g: (0, 0)),
                pl.BlockSpec((1, L_out), lambda g: (0, 0)),
            ],
            out_specs=pl.BlockSpec((1, Cout, L_out), lambda g: (g, 0, 0)),
        ),
        compiler_params=pltpu.CompilerParams(
            dimension_semantics=("parallel",),
        ),
    )(x_folded, w1_mat, b1, w2_mat, b2, mask)

    # Un-fold: drop gap/border lanes, back to NCHW.
    out = out_folded.reshape(G, Cout, Bg, S).transpose(0, 2, 1, 3).reshape(B, Cout, S)
    out = out[:, :, :N].reshape(B, Cout, Hp, Wp)[:, :, 1:-1, 1:-1]
    return out


def basic_block_ref(x, w1, bn1, w2, bn2, eps=1e-5):
    """Pure-JAX reference (NCHW, PyTorch eval-mode semantics).

    Mirrors the kernel's precision choices: BN scale folded into the weights
    before the bf16 cast, bf16 conv operands with f32 accumulation; bias,
    ReLU and the residual stay f32.
    """
    g1, be1, m1, v1 = bn1
    g2, be2, m2, v2 = bn2
    s1 = g1 / jnp.sqrt(v1 + eps)
    s2 = g2 / jnp.sqrt(v2 + eps)
    b1 = be1 - m1 * s1
    b2 = be2 - m2 * s2

    def conv(z, w):
        return jax.lax.conv_general_dilated(
            z.astype(jnp.bfloat16), w.astype(jnp.bfloat16),
            window_strides=(1, 1), padding="SAME",
            dimension_numbers=("NCHW", "OIHW", "NCHW"),
            preferred_element_type=jnp.float32)

    out = jnp.maximum(conv(x, w1 * s1[:, None, None, None]) + b1[None, :, None, None], 0.0)
    out = conv(out, w2 * s2[:, None, None, None]) + b2[None, :, None, None]
    return jnp.maximum(out + x, 0.0)


if __name__ == "__main__":
    B, C, H, W = 2, 4, 16, 16   # in_planes == planes == 4, stride=1
    key = jax.random.PRNGKey(0)
    ks = jax.random.split(key, 11)

    x = jax.random.normal(ks[0], (B, C, H, W), dtype=jnp.float32)
    w1 = 0.1 * jax.random.normal(ks[1], (C, C, 3, 3), dtype=jnp.float32)
    w2 = 0.1 * jax.random.normal(ks[2], (C, C, 3, 3), dtype=jnp.float32)

    bn1 = (1.0 + 0.1 * jax.random.normal(ks[3], (C,), dtype=jnp.float32),      # gamma
           0.1 * jax.random.normal(ks[4], (C,), dtype=jnp.float32),            # beta
           0.1 * jax.random.normal(ks[5], (C,), dtype=jnp.float32),            # running_mean
           0.5 + jnp.abs(jax.random.normal(ks[6], (C,), dtype=jnp.float32)))   # running_var
    bn2 = (1.0 + 0.1 * jax.random.normal(ks[7], (C,), dtype=jnp.float32),
           0.1 * jax.random.normal(ks[8], (C,), dtype=jnp.float32),
           0.1 * jax.random.normal(ks[9], (C,), dtype=jnp.float32),
           0.5 + jnp.abs(jax.random.normal(ks[10], (C,), dtype=jnp.float32)))

    out = jax.block_until_ready(basic_block_pallas(x, w1, bn1, w2, bn2))
    ref = jax.block_until_ready(basic_block_ref(x, w1, bn1, w2, bn2))

    assert out.shape == (B, C, H, W)
    err = jnp.max(jnp.abs(out - ref))
    assert jnp.allclose(out, ref, atol=5e-3, rtol=5e-3), f"max err = {err}"
    print("KERNEL_OK")
</pallas_src>

<mosaic_0001>
module attributes {stable_mosaic.version = 11 : i64} {
  func.func @_basic_block_kernel(%arg0: i32, %arg1: memref<1x4x762xf32, #tpu.memory_space<vmem>>, %arg2: memref<4x36xbf16, #tpu.memory_space<vmem>>, %arg3: memref<4x1xf32, #tpu.memory_space<vmem>>, %arg4: memref<4x36xbf16, #tpu.memory_space<vmem>>, %arg5: memref<4x1xf32, #tpu.memory_space<vmem>>, %arg6: memref<1x724xf32, #tpu.memory_space<vmem>>, %arg7: memref<1x4x724xf32, #tpu.memory_space<vmem>>) attributes {dimension_semantics = [#tpu.dimension_semantics<parallel>], iteration_bounds = array<i64: 1>, scalar_prefetch = 0 : i64, scratch_operands = 0 : i64, tpu.core_type = #tpu.core_type<tc>, window_params = [{transform_indices = @transform_0, window_bounds = array<i64: 1, 4, 762>}, {pipeline_mode = #tpu.pipeline_mode<synchronous>, transform_indices = @transform_1, window_bounds = array<i64: 4, 36>}, {pipeline_mode = #tpu.pipeline_mode<synchronous>, transform_indices = @transform_2, window_bounds = array<i64: 4, 1>}, {pipeline_mode = #tpu.pipeline_mode<synchronous>, transform_indices = @transform_3, window_bounds = array<i64: 4, 36>}, {pipeline_mode = #tpu.pipeline_mode<synchronous>, transform_indices = @transform_4, window_bounds = array<i64: 4, 1>}, {pipeline_mode = #tpu.pipeline_mode<synchronous>, transform_indices = @transform_5, window_bounds = array<i64: 1, 724>}, {transform_indices = @transform_6, window_bounds = array<i64: 1, 4, 724>}]} {
    %c0 = arith.constant 0 : index
    %c0_0 = arith.constant 0 : index
    %c0_1 = arith.constant 0 : index
    %0 = vector.load %arg1[%c0, %c0_0, %c0_1] : memref<1x4x762xf32, #tpu.memory_space<vmem>>, vector<1x4x762xf32>
    %1 = vector.shape_cast %0 : vector<1x4x762xf32> to vector<4x762xf32>
    %2 = arith.truncf %1 : vector<4x762xf32> to vector<4x762xbf16>
    %3 = vector.extract_strided_slice %2 {offsets = [0, 0], sizes = [4, 724], strides = [1, 1]} : vector<4x762xbf16> to vector<4x724xbf16>
    %4 = vector.extract_strided_slice %2 {offsets = [0, 1], sizes = [4, 724], strides = [1, 1]} : vector<4x762xbf16> to vector<4x724xbf16>
    %5 = vector.extract_strided_slice %2 {offsets = [0, 2], sizes = [4, 724], strides = [1, 1]} : vector<4x762xbf16> to vector<4x724xbf16>
    %6 = vector.extract_strided_slice %2 {offsets = [0, 18], sizes = [4, 724], strides = [1, 1]} : vector<4x762xbf16> to vector<4x724xbf16>
    %7 = vector.extract_strided_slice %2 {offsets = [0, 19], sizes = [4, 724], strides = [1, 1]} : vector<4x762xbf16> to vector<4x724xbf16>
    %8 = vector.extract_strided_slice %2 {offsets = [0, 20], sizes = [4, 724], strides = [1, 1]} : vector<4x762xbf16> to vector<4x724xbf16>
    %9 = vector.extract_strided_slice %2 {offsets = [0, 36], sizes = [4, 724], strides = [1, 1]} : vector<4x762xbf16> to vector<4x724xbf16>
    %10 = vector.extract_strided_slice %2 {offsets = [0, 37], sizes = [4, 724], strides = [1, 1]} : vector<4x762xbf16> to vector<4x724xbf16>
    %11 = vector.extract_strided_slice %2 {offsets = [0, 38], sizes = [4, 724], strides = [1, 1]} : vector<4x762xbf16> to vector<4x724xbf16>
    %12 = tpu.concatenate %3, %4, %5, %6, %7, %8, %9, %10, %11 in 0 : vector<4x724xbf16>, vector<4x724xbf16>, vector<4x724xbf16>, vector<4x724xbf16>, vector<4x724xbf16>, vector<4x724xbf16>, vector<4x724xbf16>, vector<4x724xbf16>, vector<4x724xbf16> -> vector<36x724xbf16>
    %c0_2 = arith.constant 0 : index
    %c0_3 = arith.constant 0 : index
    %13 = vector.load %arg2[%c0_2, %c0_3] : memref<4x36xbf16, #tpu.memory_space<vmem>>, vector<4x36xbf16>
    %cst = arith.constant dense<0.000000e+00> : vector<4x724xf32>
    %14 = tpu.matmul %13, %12, %cst {dimension_numbers = #tpu.dot_dimension_numbers<[1], [0], [0], [1], [0, 0, 1, 1], [], []>} : vector<4x36xbf16>, vector<36x724xbf16>, vector<4x724xf32> -> vector<4x724xf32>
    %c0_4 = arith.constant 0 : index
    %c0_5 = arith.constant 0 : index
    %15 = vector.load %arg3[%c0_4, %c0_5] : memref<4x1xf32, #tpu.memory_space<vmem>>, vector<4x1xf32>
    %16 = vector.broadcast %15 : vector<4x1xf32> to vector<4x724xf32>
    %17 = arith.addf %14, %16 : vector<4x724xf32>
    %cst_6 = arith.constant 0.000000e+00 : f32
    %18 = vector.broadcast %cst_6 : f32 to vector<4x724xf32>
    %19 = arith.maximumf %17, %18 : vector<4x724xf32>
    %c0_7 = arith.constant 0 : index
    %c0_8 = arith.constant 0 : index
    %20 = vector.load %arg6[%c0_7, %c0_8] : memref<1x724xf32, #tpu.memory_space<vmem>>, vector<1x724xf32>
    %21 = vector.broadcast %20 : vector<1x724xf32> to vector<4x724xf32>
    %22 = arith.mulf %19, %21 : vector<4x724xf32>
    %cst_9 = arith.constant 0.000000e+00 : bf16
    %23 = vector.broadcast %cst_9 : bf16 to vector<4x19xbf16>
    %24 = arith.truncf %22 : vector<4x724xf32> to vector<4x724xbf16>
    %25 = tpu.concatenate %23, %24, %23 in 1 : vector<4x19xbf16>, vector<4x724xbf16>, vector<4x19xbf16> -> vector<4x762xbf16>
    %26 = vector.extract_strided_slice %25 {offsets = [0, 0], sizes = [4, 724], strides = [1, 1]} : vector<4x762xbf16> to vector<4x724xbf16>
    %27 = vector.extract_strided_slice %25 {offsets = [0, 1], sizes = [4, 724], strides = [1, 1]} : vector<4x762xbf16> to vector<4x724xbf16>
    %28 = vector.extract_strided_slice %25 {offsets = [0, 2], sizes = [4, 724], strides = [1, 1]} : vector<4x762xbf16> to vector<4x724xbf16>
    %29 = vector.extract_strided_slice %25 {offsets = [0, 18], sizes = [4, 724], strides = [1, 1]} : vector<4x762xbf16> to vector<4x724xbf16>
    %30 = vector.extract_strided_slice %25 {offsets = [0, 19], sizes = [4, 724], strides = [1, 1]} : vector<4x762xbf16> to vector<4x724xbf16>
    %31 = vector.extract_strided_slice %25 {offsets = [0, 20], sizes = [4, 724], strides = [1, 1]} : vector<4x762xbf16> to vector<4x724xbf16>
    %32 = vector.extract_strided_slice %25 {offsets = [0, 36], sizes = [4, 724], strides = [1, 1]} : vector<4x762xbf16> to vector<4x724xbf16>
    %33 = vector.extract_strided_slice %25 {offsets = [0, 37], sizes = [4, 724], strides = [1, 1]} : vector<4x762xbf16> to vector<4x724xbf16>
    %34 = vector.extract_strided_slice %25 {offsets = [0, 38], sizes = [4, 724], strides = [1, 1]} : vector<4x762xbf16> to vector<4x724xbf16>
    %35 = tpu.concatenate %26, %27, %28, %29, %30, %31, %32, %33, %34 in 0 : vector<4x724xbf16>, vector<4x724xbf16>, vector<4x724xbf16>, vector<4x724xbf16>, vector<4x724xbf16>, vector<4x724xbf16>, vector<4x724xbf16>, vector<4x724xbf16>, vector<4x724xbf16> -> vector<36x724xbf16>
    %c0_10 = arith.constant 0 : index
    %c0_11 = arith.constant 0 : index
    %36 = vector.load %arg4[%c0_10, %c0_11] : memref<4x36xbf16, #tpu.memory_space<vmem>>, vector<4x36xbf16>
    %cst_12 = arith.constant dense<0.000000e+00> : vector<4x724xf32>
    %37 = tpu.matmul %36, %35, %cst_12 {dimension_numbers = #tpu.dot_dimension_numbers<[1], [0], [0], [1], [0, 0, 1, 1], [], []>} : vector<4x36xbf16>, vector<36x724xbf16>, vector<4x724xf32> -> vector<4x724xf32>
    %c0_13 = arith.constant 0 : index
    %c0_14 = arith.constant 0 : index
    %38 = vector.load %arg5[%c0_13, %c0_14] : memref<4x1xf32, #tpu.memory_space<vmem>>, vector<4x1xf32>
    %39 = vector.broadcast %38 : vector<4x1xf32> to vector<4x724xf32>
    %40 = arith.addf %37, %39 : vector<4x724xf32>
    %41 = vector.extract_strided_slice %1 {offsets = [0, 19], sizes = [4, 724], strides = [1, 1]} : vector<4x762xf32> to vector<4x724xf32>
    %42 = arith.addf %40, %41 : vector<4x724xf32>
    %cst_15 = arith.constant 0.000000e+00 : f32
    %43 = vector.broadcast %cst_15 : f32 to vector<4x724xf32>
    %44 = arith.maximumf %42, %43 : vector<4x724xf32>
    %c0_16 = arith.constant 0 : index
    %c0_17 = arith.constant 0 : index
    %c0_18 = arith.constant 0 : index
    %45 = vector.load %arg7[%c0_16, %c0_17, %c0_18] : memref<1x4x724xf32, #tpu.memory_space<vmem>>, vector<1x4x724xf32>
    %46 = vector.shape_cast %45 : vector<1x4x724xf32> to vector<4x724xf32>
    %47 = vector.shape_cast %44 : vector<4x724xf32> to vector<1x4x724xf32>
    tpu.vector_store %arg7[%c0_16, %c0_17, %c0_18], %47 {strides = array<i32>} : memref<1x4x724xf32, #tpu.memory_space<vmem>>, vector<1x4x724xf32>,
    return
  }
  func.func @transform_0(%arg0: i32) -> (i32, i32, i32) {
    %c0_i32 = arith.constant 0 : i32
    %c0_i32_0 = arith.constant 0 : i32
    %c0_i32_1 = arith.constant 0 : i32
    return %arg0, %c0_i32, %c0_i32_0 : i32, i32, i32
  }
  func.func @transform_1(%arg0: i32) -> (i32, i32) {
    %c0_i32 = arith.constant 0 : i32
    %c0_i32_0 = arith.constant 0 : i32
    %c0_i32_1 = arith.constant 0 : i32
    return %c0_i32, %c0_i32_0 : i32, i32
  }
  func.func @transform_2(%arg0: i32) -> (i32, i32) {
    %c0_i32 = arith.constant 0 : i32
    %c0_i32_0 = arith.constant 0 : i32
    %c0_i32_1 = arith.constant 0 : i32
    return %c0_i32, %c0_i32_0 : i32, i32
  }
  func.func @transform_3(%arg0: i32) -> (i32, i32) {
    %c0_i32 = arith.constant 0 : i32
    %c0_i32_0 = arith.constant 0 : i32
    %c0_i32_1 = arith.constant 0 : i32
    return %c0_i32, %c0_i32_0 : i32, i32
  }
  func.func @transform_4(%arg0: i32) -> (i32, i32) {
    %c0_i32 = arith.constant 0 : i32
    %c0_i32_0 = arith.constant 0 : i32
    %c0_i32_1 = arith.constant 0 : i32
    return %c0_i32, %c0_i32_0 : i32, i32
  }
  func.func @transform_5(%arg0: i32) -> (i32, i32) {
    %c0_i32 = arith.constant 0 : i32
    %c0_i32_0 = arith.constant 0 : i32
    %c0_i32_1 = arith.constant 0 : i32
    return %c0_i32, %c0_i32_0 : i32, i32
  }
  func.func @transform_6(%arg0: i32) -> (i32, i32, i32) {
    %c0_i32 = arith.constant 0 : i32
    %c0_i32_0 = arith.constant 0 : i32
    %c0_i32_1 = arith.constant 0 : i32
    return %arg0, %c0_i32, %c0_i32_0 : i32, i32, i32
  }
}

</mosaic_0001>

<llo_original>
// kernel: tpu_custom_call.1
$region0: #{tpu_custom_call.1}
  #allocation0 [shape = 'u32[]', space=smem, size = 0x4, offset = 0x4, fixed_abs, tag = 'smem constant byte address 0x4 - core index']
  #allocation1 [shape = 'u32[144,128]{1,0:T(1,128)}', space=vmem, size = 0x12000, scoped, tag = 'internal scratch']
  %s0 = inlined_call_operand.hbm [shape: f32[1,4,762], index: 0, kind: input, shape index: {}]
  %s1 = inlined_call_operand.vmem [shape: bf16[4,36], index: 1, kind: input, shape index: {}]
  %s2 = inlined_call_operand.vmem [shape: f32[4,1], index: 2, kind: input, shape index: {}]
  %s3 = inlined_call_operand.vmem [shape: bf16[4,36], index: 3, kind: input, shape index: {}]
  %s4 = inlined_call_operand.vmem [shape: f32[4,1], index: 4, kind: input, shape index: {}]
  %s5 = inlined_call_operand.vmem [shape: f32[1,724], index: 5, kind: input, shape index: {}]
  %s6 = inlined_call_operand.hbm [shape: f32[1,4,724], index: 6, kind: output, shape index: {}]
  %s7 = sld [smem:[#allocation0]]
  $region38: #{tpu_custom_call.1} parent=0
    _
  %s9 = ssub.s32 1, %s7
  %s10 = scalar_select 0, %s9, %s7
  $region1: #{tpu_custom_call.1} parent=0
    #allocation2 [shape = 'u8[12288]{0}', space=vmem, size = 0x3000, scoped, tag = 'input window, operand 0, single buffered']
    #allocation3 [shape = 's32[1]{0}', space=sflag, size = 0x4, scoped, tag = 'scoped memory for tpu_custom_call.1']
    #allocation4 [shape = 's32[1]{0}', space=sflag, size = 0x4, scoped, tag = 'scoped memory for tpu_custom_call.1']
    #allocation5 [shape = 'u8[12288]{0}', space=vmem, size = 0x3000, scoped, tag = 'output window, operand 0, single buffered']
    %11 = vsyncpa [#allocation3], 0
    %12 = vsyncpa [#allocation4], 0
    // Predicated region
    $region2: #{tpu_custom_call.1} parent=1 // pred_check
      _
    $region3: #{tpu_custom_call.1} parent=1 // pred_check_branch
      %14 = sbr.rel (0) target = $region5
    $region4: #{tpu_custom_call.1} parent=1 // pred_region
      %s16 = ssub.s32 384, 384
      %17 = vsyncadd [#allocation3], %s16
      %s19 = sshll.u32 [#allocation2], 4
      %s20 = int_to_ptr.vmem [resolvable:$true] %s19
      %22 = dma.hbm_to_vmem [thread:$0]  %s0, 384, %s20, [#allocation3]
    $region5: #{tpu_custom_call.1} parent=1 // pred_fallthru
      _
    // Predicated region
    $region6: #{tpu_custom_call.1} parent=1 // pred_check
      _
    $region7: #{tpu_custom_call.1} parent=1 // pred_check_branch
      %24 = sbr.rel (0) target = $region9
    $region8: #{tpu_custom_call.1} parent=1 // pred_region
      _
    $region9: #{tpu_custom_call.1} parent=1 // pred_fallthru
      _
    // Predicated region
    $region10: #{tpu_custom_call.1} parent=1 // pred_check
      _
    $region11: #{tpu_custom_call.1} parent=1 // pred_check_branch
      %26 = sbr.rel (0) target = $region13
    $region12: #{tpu_custom_call.1} parent=1 // pred_region
      _
    $region13: #{tpu_custom_call.1} parent=1 // pred_fallthru
      _
    // Predicated region
    $region14: #{tpu_custom_call.1} parent=1 // pred_check
      _
    $region15: #{tpu_custom_call.1} parent=1 // pred_check_branch
      %28 = sbr.rel (0) target = $region17
    $region16: #{tpu_custom_call.1} parent=1 // pred_region
      _
    $region17: #{tpu_custom_call.1} parent=1 // pred_fallthru
      _
    // Predicated region
    $region18: #{tpu_custom_call.1} parent=1 // pred_check
      _
    $region19: #{tpu_custom_call.1} parent=1 // pred_check_branch
      %30 = sbr.rel (0) target = $region21
    $region20: #{tpu_custom_call.1} parent=1 // pred_region
      _
    $region21: #{tpu_custom_call.1} parent=1 // pred_fallthru
      _
    // Predicated region
    $region22: #{tpu_custom_call.1} parent=1 // pred_check
      _
    $region23: #{tpu_custom_call.1} parent=1 // pred_check_branch
      %32 = sbr.rel (0) target = $region25
    $region24: #{tpu_custom_call.1} parent=1 // pred_region
      _
    $region25: #{tpu_custom_call.1} parent=1 // pred_fallthru
      _
    // Predicated region
    $region26: #{tpu_custom_call.1} parent=1 // pred_check
      _
    $region27: #{tpu_custom_call.1} parent=1 // pred_check_branch
      %34 = sbr.rel (0) target = $region29
    $region28: #{tpu_custom_call.1} parent=1 // pred_region
      %35 = dma.done [#allocation3], 384
    $region29: #{tpu_custom_call.1} parent=1 // pred_fallthru
      _
    %v37 = vld [vmem:[#allocation2] sm:$0xff]
    %v38 = vld [vmem:[#allocation2 + $0x8] sm:$0xff]
    %v39 = vld [vmem:[#allocation2 + $0x10] sm:$0xff]
    %v43 = vcombine.high %v37, %v37
    %v44 = vcombine.high %v38, %v38
    %v45 = vcombine.high %v39, %v39
    %v49 = vpack.c.bf16 %v37, %v37
    %v50 = vpack.c.bf16 %v43, %v43
    %v51 = vpack.c.bf16 %v38, %v38
    %v52 = vpack.c.bf16 %v44, %v44
    %v53 = vpack.c.bf16 %v39, %v39
    %v54 = vpack.c.bf16 %v45, %v45
    %v61 = vrot.slane %v49, 6
    %v62 = vrot.slane %v50, 6
    %v63 = vrot.slane %v51, 6
    %v64 = vrot.slane %v52, 6
    %v65 = vrot.slane %v53, 6
    %v66 = vrot.slane %v54, 6
    %67 = vrot.lane.b32.xlu0 %v61, 127
    %v68 = vpop.permute.xlu0 %67
    %69 = vrot.lane.b32.xlu0 %v62, 127
    %v70 = vpop.permute.xlu0 %69
    %71 = vrot.lane.b32.xlu0 %v63, 127
    %v72 = vpop.permute.xlu0 %71
    %73 = vrot.lane.b32.xlu0 %v64, 127
    %v74 = vpop.permute.xlu0 %73
    %75 = vrot.lane.b32.xlu0 %v65, 127
    %v76 = vpop.permute.xlu0 %75
    %77 = vrot.lane.b32.xlu0 %v66, 127
    %v78 = vpop.permute.xlu0 %77
    %vm79 = vcmask 1039360
    %v80 = vsel %vm79, %v68, %v70
    %v81 = vsel %vm79, %v70, %v72
    %v82 = vsel %vm79, %v72, %v74
    %v83 = vsel %vm79, %v74, %v76
    %v84 = vsel %vm79, %v76, %v78
    %v85 = vrot.slane %v49, 4
    %v86 = vrot.slane %v50, 4
    %v87 = vrot.slane %v51, 4
    %v88 = vrot.slane %v52, 4
    %v89 = vrot.slane %v53, 4
    %v90 = vrot.slane %v54, 4
    %91 = vrot.lane.b32.xlu0 %v85, 126
    %v92 = vpop.permute.xlu0 %91
    %93 = vrot.lane.b32.xlu0 %v86, 126
    %v94 = vpop.permute.xlu0 %93
    %95 = vrot.lane.b32.xlu0 %v87, 126
    %v96 = vpop.permute.xlu0 %95
    %97 = vrot.lane.b32.xlu0 %v88, 126
    %v98 = vpop.permute.xlu0 %97
    %99 = vrot.lane.b32.xlu0 %v89, 126
    %v100 = vpop.permute.xlu0 %99
    %101 = vrot.lane.b32.xlu0 %v90, 126
    %v102 = vpop.permute.xlu0 %101
    %vm103 = vcmask 1031168
    %v104 = vsel %vm103, %v92, %v94
    %v105 = vsel %vm103, %v94, %v96
    %v106 = vsel %vm103, %v96, %v98
    %v107 = vsel %vm103, %v98, %v100
    %v108 = vsel %vm103, %v100, %v102
    %v109 = vrot.slane %v49, 2
    %v110 = vrot.slane %v50, 2
    %v111 = vrot.slane %v51, 2
    %v112 = vrot.slane %v52, 2
    %v113 = vrot.slane %v53, 2
    %v114 = vrot.slane %v54, 2
    %115 = vrot.lane.b32.xlu0 %v109, 110
    %v116 = vpop.permute.xlu0 %115
    %117 = vrot.lane.b32.xlu0 %v110, 110
    %v118 = vpop.permute.xlu0 %117
    %119 = vrot.lane.b32.xlu0 %v111, 110
    %v120 = vpop.permute.xlu0 %119
    %121 = vrot.lane.b32.xlu0 %v112, 110
    %v122 = vpop.permute.xlu0 %121
    %123 = vrot.lane.b32.xlu0 %v113, 110
    %v124 = vpop.permute.xlu0 %123
    %125 = vrot.lane.b32.xlu0 %v114, 110
    %v126 = vpop.permute.xlu0 %125
    %vm127 = vcmask 900096
    %v128 = vsel %vm127, %v116, %v118
    %v129 = vsel %vm127, %v118, %v120
    %v130 = vsel %vm127, %v120, %v122
    %v131 = vsel %vm127, %v122, %v124
    %v132 = vsel %vm127, %v124, %v126
    %133 = vrot.lane.b32.xlu0 %v49, 109
    %v134 = vpop.permute.xlu0 %133
    %135 = vrot.lane.b32.xlu0 %v50, 109
    %v136 = vpop.permute.xlu0 %135
    %137 = vrot.lane.b32.xlu0 %v51, 109
    %v138 = vpop.permute.xlu0 %137
    %139 = vrot.lane.b32.xlu0 %v52, 109
    %v140 = vpop.permute.xlu0 %139
    %141 = vrot.lane.b32.xlu0 %v53, 109
    %v142 = vpop.permute.xlu0 %141
    %143 = vrot.lane.b32.xlu0 %v54, 109
    %v144 = vpop.permute.xlu0 %143
    %vm145 = vcmask 891904
    %v146 = vsel %vm145, %v134, %v136
    %v147 = vsel %vm145, %v136, %v138
    %v148 = vsel %vm145, %v138, %v140
    %v149 = vsel %vm145, %v140, %v142
    %v150 = vsel %vm145, %v142, %v144
    %151 = vrot.lane.b32.xlu0 %v61, 108
    %v152 = vpop.permute.xlu0 %151
    %153 = vrot.lane.b32.xlu0 %v62, 108
    %v154 = vpop.permute.xlu0 %153
    %155 = vrot.lane.b32.xlu0 %v63, 108
    %v156 = vpop.permute.xlu0 %155
    %157 = vrot.lane.b32.xlu0 %v64, 108
    %v158 = vpop.permute.xlu0 %157
    %159 = vrot.lane.b32.xlu0 %v65, 108
    %v160 = vpop.permute.xlu0 %159
    %161 = vrot.lane.b32.xlu0 %v66, 108
    %v162 = vpop.permute.xlu0 %161
    %vm163 = vcmask 883712
    %v164 = vsel %vm163, %v152, %v154
    %v165 = vsel %vm163, %v154, %v156
    %v166 = vsel %vm163, %v156, %v158
    %v167 = vsel %vm163, %v158, %v160
    %v168 = vsel %vm163, %v160, %v162
    %169 = vrot.lane.b32.xlu0 %v85, 92
    %v170 = vpop.permute.xlu0 %169
    %171 = vrot.lane.b32.xlu0 %v86, 92
    %v172 = vpop.permute.xlu0 %171
    %173 = vrot.lane.b32.xlu0 %v87, 92
    %v174 = vpop.permute.xlu0 %173
    %175 = vrot.lane.b32.xlu0 %v88, 92
    %v176 = vpop.permute.xlu0 %175
    %177 = vrot.lane.b32.xlu0 %v89, 92
    %v178 = vpop.permute.xlu0 %177
    %179 = vrot.lane.b32.xlu0 %v90, 92
    %v180 = vpop.permute.xlu0 %179
    %vm181 = vcmask 752640
    %v182 = vsel %vm181, %v170, %v172
    %v183 = vsel %vm181, %v172, %v174
    %v184 = vsel %vm181, %v174, %v176
    %v185 = vsel %vm181, %v176, %v178
    %v186 = vsel %vm181, %v178, %v180
    %187 = vrot.lane.b32.xlu0 %v109, 91
    %v188 = vpop.permute.xlu0 %187
    %189 = vrot.lane.b32.xlu0 %v110, 91
    %v190 = vpop.permute.xlu0 %189
    %191 = vrot.lane.b32.xlu0 %v111, 91
    %v192 = vpop.permute.xlu0 %191
    %193 = vrot.lane.b32.xlu0 %v112, 91
    %v194 = vpop.permute.xlu0 %193
    %195 = vrot.lane.b32.xlu0 %v113, 91
    %v196 = vpop.permute.xlu0 %195
    %197 = vrot.lane.b32.xlu0 %v114, 91
    %v198 = vpop.permute.xlu0 %197
    %vm199 = vcmask 744448
    %v200 = vsel %vm199, %v188, %v190
    %v201 = vsel %vm199, %v190, %v192
    %v202 = vsel %vm199, %v192, %v194
    %v203 = vsel %vm199, %v194, %v196
    %v204 = vsel %vm199, %v196, %v198
    %205 = vrot.lane.b32.xlu0 %v49, 90
    %v206 = vpop.permute.xlu0 %205
    %207 = vrot.lane.b32.xlu0 %v50, 90
    %v208 = vpop.permute.xlu0 %207
    %209 = vrot.lane.b32.xlu0 %v51, 90
    %v210 = vpop.permute.xlu0 %209
    %211 = vrot.lane.b32.xlu0 %v52, 90
    %v212 = vpop.permute.xlu0 %211
    %213 = vrot.lane.b32.xlu0 %v53, 90
    %v214 = vpop.permute.xlu0 %213
    %215 = vrot.lane.b32.xlu0 %v54, 90
    %v216 = vpop.permute.xlu0 %215
    %vm217 = vcmask 736256
    %v218 = vsel %vm217, %v206, %v208
    %v219 = vsel %vm217, %v208, %v210
    %v220 = vsel %vm217, %v210, %v212
    %v221 = vsel %vm217, %v212, %v214
    %v222 = vsel %vm217, %v214, %v216
    %vm223 = vcmask 1041408
    %v226 = vsel %vm223, %v49, %v80
    %v229 = vsel %vm223, %v50, %v81
    %v232 = vsel %vm223, %v51, %v82
    %v235 = vsel %vm223, %v52, %v83
    %v238 = vsel %vm223, %v53, %v84
    %v241 = vsel %vm223, %v54, %v78
    %vm242 = vcmask 1043456
    %v244 = vsel %vm242, %v226, %v104
    %v246 = vsel %vm242, %v229, %v105
    %v248 = vsel %vm242, %v232, %v106
    %v250 = vsel %vm242, %v235, %v107
    %v252 = vsel %vm242, %v238, %v108
    %v254 = vsel %vm242, %v241, %v102
    %vm255 = vcmask 1045504
    %v257 = vsel %vm255, %v244, %v128
    %v260 = vsel %vm255, %v246, %v129
    %v263 = vsel %vm255, %v248, %v130
    %v266 = vsel %vm255, %v250, %v131
    %v269 = vsel %vm255, %v252, %v132
    %v272 = vsel %vm255, %v254, %v126
    %v276 = vsel %vm223, %v146, %v164
    %v279 = vsel %vm223, %v147, %v165
    %v282 = vsel %vm223, %v148, %v166
    %v285 = vsel %vm223, %v149, %v167
    %v288 = vsel %vm223, %v150, %v168
    %v291 = vsel %vm223, %v144, %v162
    %v293 = vsel %vm242, %v276, %v182
    %v295 = vsel %vm242, %v279, %v183
    %v297 = vsel %vm242, %v282, %v184
    %v299 = vsel %vm242, %v285, %v185
    %v301 = vsel %vm242, %v288, %v186
    %v303 = vsel %vm242, %v291, %v180
    %v305 = vsel %vm255, %v293, %v200
    %v308 = vsel %vm255, %v295, %v201
    %v311 = vsel %vm255, %v297, %v202
    %v314 = vsel %vm255, %v299, %v203
    %v317 = vsel %vm255, %v301, %v204
    %v320 = vsel %vm255, %v303, %v198
    %v322 = vld [vmem:[%s1] sm:$0x3]
    %v323 = vld [vmem:[%s2] sm:$0xf]
    %325 = vset.pattern.permute.xlu0 0
    %326 = vperm.xlu0 %325, %v323
    %v327 = vpop.permute.xlu0 %326
    %vm329 = vcmask 293888
    %v331 = vsel %vm329, %v322, 0
    %v334 = vsel %vm223, %v218, 0
    %v337 = vsel %vm223, %v219, 0
    %v340 = vsel %vm223, %v220, 0
    %v343 = vsel %vm223, %v221, 0
    %v346 = vsel %vm223, %v222, 0
    %v349 = vsel %vm223, %v216, 0
    %351 = vmatprep.subr.bf16.mxu0 0
    %352 = vmatpush1.bf16.msra.mxu0 0
    %353 = vmatprep.subr.bf16.mxu0 0
    %354 = vmatpush1.bf16.msra.mxu0 0
    %355 = vmatprep.subr.bf16.mxu0 0
    %356 = vmatpush1.bf16.msra.mxu0 0
    %357 = vmatprep.subr.bf16.mxu0 0
    %358 = vmatpush1.bf16.msra.mxu0 0
    %359 = vmatprep.subr.bf16.mxu0 0
    %360 = vmatpush1.bf16.msra.mxu0 0
    %361 = vmatprep.subr.bf16.mxu0 %v337
    %362 = vmatpush1.bf16.msra.mxu0 %v334
    %363 = vmatprep.subr.bf16.mxu0 %v308
    %364 = vmatpush1.bf16.msra.mxu0 %v305
    %365 = vmatprep.subr.bf16.mxu0 %v260
    %366 = vmatpush1.bf16.msra.mxu0 %v257
    %367 = vmatprep.subr.bf16.mxu0 0
    %368 = vmatpush2.bf16.msra.mxu0 0
    %369 = vmatprep.subr.bf16.mxu0 0
    %370 = vmatpush2.bf16.msra.mxu0 0
    %371 = vmatprep.subr.bf16.mxu0 0
    %372 = vmatpush2.bf16.msra.mxu0 0
    %373 = vmatprep.subr.bf16.mxu0 0
    %374 = vmatpush2.bf16.msra.mxu0 0
    %375 = vmatprep.subr.bf16.mxu0 0
    %376 = vmatpush2.bf16.msra.mxu0 0
    %377 = vmatprep.subr.bf16.mxu0 0
    %378 = vmatpush2.bf16.msra.mxu0 0
    %379 = vmatprep.subr.bf16.mxu0 0
    %380 = vmatpush2.bf16.msra.mxu0 0
    %381 = vmatprep.subr.bf16.mxu0 0
    %382 = vmatpush2.bf16.msra.mxu0 0
    %383 = vmatprep.mubr.bf16.mxu0 0
    %384 = vmatmul.mubr.bf16.gmra.mxu0 %v331
    %v385 = vpop.f32.mrf.mxu0
    %v386 = vadd.f32 %v327, %v385
    %v387 = vpop.f32.mrf.mxu0
    %v388 = vadd.f32 %v327, %v387
    %v389 = vpop.f32.mrf.mxu0
    %v390 = vpop.f32.mrf.mxu0
    %391 = vdwg.mxu0
    %392 = vmatprep.subr.bf16.mxu0 0
    %393 = vmatpush1.bf16.msra.mxu0 0
    %394 = vmatprep.subr.bf16.mxu0 0
    %395 = vmatpush1.bf16.msra.mxu0 0
    %396 = vmatprep.subr.bf16.mxu0 0
    %397 = vmatpush1.bf16.msra.mxu0 0
    %398 = vmatprep.subr.bf16.mxu0 0
    %399 = vmatpush1.bf16.msra.mxu0 0
    %400 = vmatprep.subr.bf16.mxu0 0
    %401 = vmatpush1.bf16.msra.mxu0 0
    %402 = vmatprep.subr.bf16.mxu0 %v343
    %403 = vmatpush1.bf16.msra.mxu0 %v340
    %404 = vmatprep.subr.bf16.mxu0 %v314
    %405 = vmatpush1.bf16.msra.mxu0 %v311
    %406 = vmatprep.subr.bf16.mxu0 %v266
    %407 = vmatpush1.bf16.msra.mxu0 %v263
    %408 = vmatprep.subr.bf16.mxu0 0
    %409 = vmatpush2.bf16.msra.mxu0 0
    %410 = vmatprep.subr.bf16.mxu0 0
    %411 = vmatpush2.bf16.msra.mxu0 0
    %412 = vmatprep.subr.bf16.mxu0 0
    %413 = vmatpush2.bf16.msra.mxu0 0
    %414 = vmatprep.subr.bf16.mxu0 0
    %415 = vmatpush2.bf16.msra.mxu0 0
    %416 = vmatprep.subr.bf16.mxu0 0
    %417 = vmatpush2.bf16.msra.mxu0 0
    %418 = vmatprep.subr.bf16.mxu0 0
    %419 = vmatpush2.bf16.msra.mxu0 0
    %420 = vmatprep.subr.bf16.mxu0 0
    %421 = vmatpush2.bf16.msra.mxu0 0
    %422 = vmatprep.subr.bf16.mxu0 0
    %423 = vmatpush2.bf16.msra.mxu0 0
    %424 = vmatprep.mubr.bf16.mxu0 0
    %425 = vmatmul.mubr.bf16.gmra.mxu0 %v331
    %v426 = vpop.f32.mrf.mxu0
    %v427 = vadd.f32 %v327, %v426
    %v428 = vpop.f32.mrf.mxu0
    %v429 = vadd.f32 %v327, %v428
    %v430 = vpop.f32.mrf.mxu0
    %v431 = vpop.f32.mrf.mxu0
    %432 = vdwg.mxu0
    %433 = vmatprep.subr.bf16.mxu0 0
    %434 = vmatpush1.bf16.msra.mxu0 0
    %435 = vmatprep.subr.bf16.mxu0 0
    %436 = vmatpush1.bf16.msra.mxu0 0
    %437 = vmatprep.subr.bf16.mxu0 0
    %438 = vmatpush1.bf16.msra.mxu0 0
    %439 = vmatprep.subr.bf16.mxu0 0
    %440 = vmatpush1.bf16.msra.mxu0 0
    %441 = vmatprep.subr.bf16.mxu0 0
    %442 = vmatpush1.bf16.msra.mxu0 0
    %443 = vmatprep.subr.bf16.mxu0 %v349
    %444 = vmatpush1.bf16.msra.mxu0 %v346
    %445 = vmatprep.subr.bf16.mxu0 %v320
    %446 = vmatpush1.bf16.msra.mxu0 %v317
    %447 = vmatprep.subr.bf16.mxu0 %v272
    %448 = vmatpush1.bf16.msra.mxu0 %v269
    %449 = vmatprep.subr.bf16.mxu0 0
    %450 = vmatpush2.bf16.msra.mxu0 0
    %451 = vmatprep.subr.bf16.mxu0 0
    %452 = vmatpush2.bf16.msra.mxu0 0
    %453 = vmatprep.subr.bf16.mxu0 0
    %454 = vmatpush2.bf16.msra.mxu0 0
    %455 = vmatprep.subr.bf16.mxu0 0
    %456 = vmatpush2.bf16.msra.mxu0 0
    %457 = vmatprep.subr.bf16.mxu0 0
    %458 = vmatpush2.bf16.msra.mxu0 0
    %459 = vmatprep.subr.bf16.mxu0 0
    %460 = vmatpush2.bf16.msra.mxu0 0
    %461 = vmatprep.subr.bf16.mxu0 0
    %462 = vmatpush2.bf16.msra.mxu0 0
    %463 = vmatprep.subr.bf16.mxu0 0
    %464 = vmatpush2.bf16.msra.mxu0 0
    %465 = vmatprep.mubr.bf16.mxu0 0
    %466 = vmatmul.mubr.bf16.gmra.mxu0 %v331
    %v467 = vpop.f32.mrf.mxu0
    %v468 = vadd.f32 %v327, %v467
    %v469 = vpop.f32.mrf.mxu0
    %v470 = vadd.f32 %v327, %v469
    %v471 = vpop.f32.mrf.mxu0
    %v472 = vpop.f32.mrf.mxu0
    %473 = vdwg.mxu0
    %v474 = vmax.f32 %v386, 0.0
    %v475 = vmax.f32 %v388, 0.0
    %v476 = vmax.f32 %v427, 0.0
    %v477 = vmax.f32 %v429, 0.0
    %v478 = vmax.f32 %v468, 0.0
    %v479 = vmax.f32 %v470, 0.0
    %v480 = vld [vmem:[%s5] sm:$0x3f]
    %v482 = vlaneseq
    %v483 = vshrl.u32 %v482, 7
    %v484 = vsub.s32 0, %v483
    %v485 = vrot.slane %v480, %v484
    %v486 = vlaneseq
    %v487 = vshrl.u32 %v486, 7
    %v488 = vsub.s32 1, %v487
    %v489 = vrot.slane %v480, %v488
    %v490 = vlaneseq
    %v491 = vshrl.u32 %v490, 7
    %v492 = vsub.s32 2, %v491
    %v493 = vrot.slane %v480, %v492
    %v494 = vlaneseq
    %v495 = vshrl.u32 %v494, 7
    %v496 = vsub.s32 3, %v495
    %v497 = vrot.slane %v480, %v496
    %v498 = vlaneseq
    %v499 = vshrl.u32 %v498, 7
    %v500 = vsub.s32 4, %v499
    %v501 = vrot.slane %v480, %v500
    %v502 = vlaneseq
    %v503 = vshrl.u32 %v502, 7
    %v504 = vsub.s32 5, %v503
    %v505 = vrot.slane %v480, %v504
    %v512 = vmul.f32 %v474, %v485
    %v513 = vmul.f32 %v475, %v489
    %v514 = vmul.f32 %v476, %v493
    %v515 = vmul.f32 %v477, %v497
    %v516 = vmul.f32 %v478, %v501
    %v517 = vmul.f32 %v479, %v505
    %v518 = vpack.c.bf16 %v512, %v512
    %v519 = vpack.c.bf16 %v513, %v513
    %v520 = vpack.c.bf16 %v514, %v514
    %v521 = vpack.c.bf16 %v515, %v515
    %v522 = vpack.c.bf16 %v516, %v516
    %v523 = vpack.c.bf16 %v517, %v517
    %530 = vrot.lane.b32.xlu0 %v518, 19
    %v531 = vpop.permute.xlu0 %530
    %532 = vrot.lane.b32.xlu0 %v519, 19
    %v533 = vpop.permute.xlu0 %532
    %534 = vrot.lane.b32.xlu0 %v520, 19
    %v535 = vpop.permute.xlu0 %534
    %536 = vrot.lane.b32.xlu0 %v521, 19
    %v537 = vpop.permute.xlu0 %536
    %538 = vrot.lane.b32.xlu0 %v522, 19
    %v539 = vpop.permute.xlu0 %538
    %540 = vrot.lane.b32.xlu0 %v523, 19
    %v541 = vpop.permute.xlu0 %540
    %vm542 = vcmask 154624
    %v543 = vsel %vm542, %v531, %v533
    %v544 = vsel %vm542, %v533, %v535
    %v545 = vsel %vm542, %v535, %v537
    %v546 = vsel %vm542, %v537, %v539
    %v547 = vsel %vm542, %v539, %v541
    %vm548 = vcmask 154624
    %v551 = vsel %vm548, 0, %v531
    %vm552 = vcmask 842752
    %v554 = vsel %vm552, %v547, 0
    %v557 = vrot.slane %v551, 6
    %v558 = vrot.slane %v543, 6
    %v559 = vrot.slane %v544, 6
    %v560 = vrot.slane %v545, 6
    %v561 = vrot.slane %v546, 6
    %v562 = vrot.slane %v554, 6
    %563 = vrot.lane.b32.xlu0 %v557, 127
    %v564 = vpop.permute.xlu0 %563
    %565 = vrot.lane.b32.xlu0 %v558, 127
    %v566 = vpop.permute.xlu0 %565
    %567 = vrot.lane.b32.xlu0 %v559, 127
    %v568 = vpop.permute.xlu0 %567
    %569 = vrot.lane.b32.xlu0 %v560, 127
    %v570 = vpop.permute.xlu0 %569
    %571 = vrot.lane.b32.xlu0 %v561, 127
    %v572 = vpop.permute.xlu0 %571
    %573 = vrot.lane.b32.xlu0 %v562, 127
    %v574 = vpop.permute.xlu0 %573
    %v575 = vsel %vm79, %v564, %v566
    %v576 = vsel %vm79, %v566, %v568
    %v577 = vsel %vm79, %v568, %v570
    %v578 = vsel %vm79, %v570, %v572
    %v579 = vsel %vm79, %v572, %v574
    %v580 = vrot.slane %v551, 4
    %v581 = vrot.slane %v543, 4
    %v582 = vrot.slane %v544, 4
    %v583 = vrot.slane %v545, 4
    %v584 = vrot.slane %v546, 4
    %v585 = vrot.slane %v554, 4
    %586 = vrot.lane.b32.xlu0 %v580, 126
    %v587 = vpop.permute.xlu0 %586
    %588 = vrot.lane.b32.xlu0 %v581, 126
    %v589 = vpop.permute.xlu0 %588
    %590 = vrot.lane.b32.xlu0 %v582, 126
    %v591 = vpop.permute.xlu0 %590
    %592 = vrot.lane.b32.xlu0 %v583, 126
    %v593 = vpop.permute.xlu0 %592
    %594 = vrot.lane.b32.xlu0 %v584, 126
    %v595 = vpop.permute.xlu0 %594
    %596 = vrot.lane.b32.xlu0 %v585, 126
    %v597 = vpop.permute.xlu0 %596
    %v598 = vsel %vm103, %v587, %v589
    %v599 = vsel %vm103, %v589, %v591
    %v600 = vsel %vm103, %v591, %v593
    %v601 = vsel %vm103, %v593, %v595
    %v602 = vsel %vm103, %v595, %v597
    %v603 = vrot.slane %v551, 2
    %v604 = vrot.slane %v543, 2
    %v605 = vrot.slane %v544, 2
    %v606 = vrot.slane %v545, 2
    %v607 = vrot.slane %v546, 2
    %v608 = vrot.slane %v554, 2
    %609 = vrot.lane.b32.xlu0 %v603, 110
    %v610 = vpop.permute.xlu0 %609
    %611 = vrot.lane.b32.xlu0 %v604, 110
    %v612 = vpop.permute.xlu0 %611
    %613 = vrot.lane.b32.xlu0 %v605, 110
    %v614 = vpop.permute.xlu0 %613
    %615 = vrot.lane.b32.xlu0 %v606, 110
    %v616 = vpop.permute.xlu0 %615
    %617 = vrot.lane.b32.xlu0 %v607, 110
    %v618 = vpop.permute.xlu0 %617
    %619 = vrot.lane.b32.xlu0 %v608, 110
    %v620 = vpop.permute.xlu0 %619
    %v621 = vsel %vm127, %v610, %v612
    %v622 = vsel %vm127, %v612, %v614
    %v623 = vsel %vm127, %v614, %v616
    %v624 = vsel %vm127, %v616, %v618
    %v625 = vsel %vm127, %v618, %v620
    %626 = vrot.lane.b32.xlu0 %v551, 109
    %v627 = vpop.permute.xlu0 %626
    %628 = vrot.lane.b32.xlu0 %v543, 109
    %v629 = vpop.permute.xlu0 %628
    %630 = vrot.lane.b32.xlu0 %v544, 109
    %v631 = vpop.permute.xlu0 %630
    %632 = vrot.lane.b32.xlu0 %v545, 109
    %v633 = vpop.permute.xlu0 %632
    %634 = vrot.lane.b32.xlu0 %v546, 109
    %v635 = vpop.permute.xlu0 %634
    %636 = vrot.lane.b32.xlu0 %v554, 109
    %v637 = vpop.permute.xlu0 %636
    %v638 = vsel %vm145, %v627, %v629
    %v639 = vsel %vm145, %v629, %v631
    %v640 = vsel %vm145, %v631, %v633
    %v641 = vsel %vm145, %v633, %v635
    %v642 = vsel %vm145, %v635, %v637
    %643 = vrot.lane.b32.xlu0 %v557, 108
    %v644 = vpop.permute.xlu0 %643
    %645 = vrot.lane.b32.xlu0 %v558, 108
    %v646 = vpop.permute.xlu0 %645
    %647 = vrot.lane.b32.xlu0 %v559, 108
    %v648 = vpop.permute.xlu0 %647
    %649 = vrot.lane.b32.xlu0 %v560, 108
    %v650 = vpop.permute.xlu0 %649
    %651 = vrot.lane.b32.xlu0 %v561, 108
    %v652 = vpop.permute.xlu0 %651
    %653 = vrot.lane.b32.xlu0 %v562, 108
    %v654 = vpop.permute.xlu0 %653
    %v655 = vsel %vm163, %v644, %v646
    %v656 = vsel %vm163, %v646, %v648
    %v657 = vsel %vm163, %v648, %v650
    %v658 = vsel %vm163, %v650, %v652
    %v659 = vsel %vm163, %v652, %v654
    %660 = vrot.lane.b32.xlu0 %v580, 92
    %v661 = vpop.permute.xlu0 %660
    %662 = vrot.lane.b32.xlu0 %v581, 92
    %v663 = vpop.permute.xlu0 %662
    %664 = vrot.lane.b32.xlu0 %v582, 92
    %v665 = vpop.permute.xlu0 %664
    %666 = vrot.lane.b32.xlu0 %v583, 92
    %v667 = vpop.permute.xlu0 %666
    %668 = vrot.lane.b32.xlu0 %v584, 92
    %v669 = vpop.permute.xlu0 %668
    %670 = vrot.lane.b32.xlu0 %v585, 92
    %v671 = vpop.permute.xlu0 %670
    %v672 = vsel %vm181, %v661, %v663
    %v673 = vsel %vm181, %v663, %v665
    %v674 = vsel %vm181, %v665, %v667
    %v675 = vsel %vm181, %v667, %v669
    %v676 = vsel %vm181, %v669, %v671
    %677 = vrot.lane.b32.xlu0 %v603, 91
    %v678 = vpop.permute.xlu0 %677
    %679 = vrot.lane.b32.xlu0 %v604, 91
    %v680 = vpop.permute.xlu0 %679
    %681 = vrot.lane.b32.xlu0 %v605, 91
    %v682 = vpop.permute.xlu0 %681
    %683 = vrot.lane.b32.xlu0 %v606, 91
    %v684 = vpop.permute.xlu0 %683
    %685 = vrot.lane.b32.xlu0 %v607, 91
    %v686 = vpop.permute.xlu0 %685
    %687 = vrot.lane.b32.xlu0 %v608, 91
    %v688 = vpop.permute.xlu0 %687
    %v689 = vsel %vm199, %v678, %v680
    %v690 = vsel %vm199, %v680, %v682
    %v691 = vsel %vm199, %v682, %v684
    %v692 = vsel %vm199, %v684, %v686
    %v693 = vsel %vm199, %v686, %v688
    %694 = vrot.lane.b32.xlu0 %v551, 90
    %v695 = vpop.permute.xlu0 %694
    %696 = vrot.lane.b32.xlu0 %v543, 90
    %v697 = vpop.permute.xlu0 %696
    %698 = vrot.lane.b32.xlu0 %v544, 90
    %v699 = vpop.permute.xlu0 %698
    %700 = vrot.lane.b32.xlu0 %v545, 90
    %v701 = vpop.permute.xlu0 %700
    %702 = vrot.lane.b32.xlu0 %v546, 90
    %v703 = vpop.permute.xlu0 %702
    %704 = vrot.lane.b32.xlu0 %v554, 90
    %v705 = vpop.permute.xlu0 %704
    %v706 = vsel %vm217, %v695, %v697
    %v707 = vsel %vm217, %v697, %v699
    %v708 = vsel %vm217, %v699, %v701
    %v709 = vsel %vm217, %v701, %v703
    %v710 = vsel %vm217, %v703, %v705
    %v712 = vsel %vm223, %v551, %v575
    %v715 = vsel %vm223, %v543, %v576
    %v718 = vsel %vm223, %v544, %v577
    %v721 = vsel %vm223, %v545, %v578
    %v724 = vsel %vm223, %v546, %v579
    %v726 = vsel %vm223, %v554, %v574
    %v728 = vsel %vm242, %v712, %v598
    %v730 = vsel %vm242, %v715, %v599
    %v732 = vsel %vm242, %v718, %v600
    %v734 = vsel %vm242, %v721, %v601
    %v736 = vsel %vm242, %v724, %v602
    %v738 = vsel %vm242, %v726, %v597
    %v740 = vsel %vm255, %v728, %v621
    %v743 = vsel %vm255, %v730, %v622
    %v746 = vsel %vm255, %v732, %v623
    %v749 = vsel %vm255, %v734, %v624
    %v752 = vsel %vm255, %v736, %v625
    %v755 = vsel %vm255, %v738, %v620
    %v759 = vsel %vm223, %v638, %v655
    %v762 = vsel %vm223, %v639, %v656
    %v765 = vsel %vm223, %v640, %v657
    %v768 = vsel %vm223, %v641, %v658
    %v771 = vsel %vm223, %v642, %v659
    %v774 = vsel %vm223, %v637, %v654
    %v776 = vsel %vm242, %v759, %v672
    %v778 = vsel %vm242, %v762, %v673
    %v780 = vsel %vm242, %v765, %v674
    %v782 = vsel %vm242, %v768, %v675
    %v784 = vsel %vm242, %v771, %v676
    %v786 = vsel %vm242, %v774, %v671
    %v788 = vsel %vm255, %v776, %v689
    %v791 = vsel %vm255, %v778, %v690
    %v794 = vsel %vm255, %v780, %v691
    %v797 = vsel %vm255, %v782, %v692
    %v800 = vsel %vm255, %v784, %v693
    %v803 = vsel %vm255, %v786, %v688
    %v805 = vld [vmem:[%s3] sm:$0x3]
    %v806 = vld [vmem:[%s4] sm:$0xf]
    %808 = vset.pattern.permute.xlu0 0
    %809 = vperm.xlu0 %808, %v806
    %v810 = vpop.permute.xlu0 %809
    %v813 = vsel %vm329, %v805, 0
    %v816 = vsel %vm223, %v706, 0
    %v819 = vsel %vm223, %v707, 0
    %v822 = vsel %vm223, %v708, 0
    %v825 = vsel %vm223, %v709, 0
    %v828 = vsel %vm223, %v710, 0
    %v831 = vsel %vm223, %v705, 0
    %833 = vmatprep.subr.bf16.mxu0 0
    %834 = vmatpush1.bf16.msra.mxu0 0
    %835 = vmatprep.subr.bf16.mxu0 0
    %836 = vmatpush1.bf16.msra.mxu0 0
    %837 = vmatprep.subr.bf16.mxu0 0
    %838 = vmatpush1.bf16.msra.mxu0 0
    %839 = vmatprep.subr.bf16.mxu0 0
    %840 = vmatpush1.bf16.msra.mxu0 0
    %841 = vmatprep.subr.bf16.mxu0 0
    %842 = vmatpush1.bf16.msra.mxu0 0
    %843 = vmatprep.subr.bf16.mxu0 %v819
    %844 = vmatpush1.bf16.msra.mxu0 %v816
    %845 = vmatprep.subr.bf16.mxu0 %v791
    %846 = vmatpush1.bf16.msra.mxu0 %v788
    %847 = vmatprep.subr.bf16.mxu0 %v743
    %848 = vmatpush1.bf16.msra.mxu0 %v740
    %849 = vmatprep.subr.bf16.mxu0 0
    %850 = vmatpush2.bf16.msra.mxu0 0
    %851 = vmatprep.subr.bf16.mxu0 0
    %852 = vmatpush2.bf16.msra.mxu0 0
    %853 = vmatprep.subr.bf16.mxu0 0
    %854 = vmatpush2.bf16.msra.mxu0 0
    %855 = vmatprep.subr.bf16.mxu0 0
    %856 = vmatpush2.bf16.msra.mxu0 0
    %857 = vmatprep.subr.bf16.mxu0 0
    %858 = vmatpush2.bf16.msra.mxu0 0
    %859 = vmatprep.subr.bf16.mxu0 0
    %860 = vmatpush2.bf16.msra.mxu0 0
    %861 = vmatprep.subr.bf16.mxu0 0
    %862 = vmatpush2.bf16.msra.mxu0 0
    %863 = vmatprep.subr.bf16.mxu0 0
    %864 = vmatpush2.bf16.msra.mxu0 0
    %865 = vmatprep.mubr.bf16.mxu0 0
    %866 = vmatmul.mubr.bf16.gmra.mxu0 %v813
    %v867 = vpop.f32.mrf.mxu0
    %v868 = vadd.f32 %v810, %v867
    %v869 = vpop.f32.mrf.mxu0
    %v870 = vadd.f32 %v810, %v869
    %v871 = vpop.f32.mrf.mxu0
    %v872 = vpop.f32.mrf.mxu0
    %873 = vdwg.mxu0
    %874 = vmatprep.subr.bf16.mxu0 0
    %875 = vmatpush1.bf16.msra.mxu0 0
    %876 = vmatprep.subr.bf16.mxu0 0
    %877 = vmatpush1.bf16.msra.mxu0 0
    %878 = vmatprep.subr.bf16.mxu0 0
    %879 = vmatpush1.bf16.msra.mxu0 0
    %880 = vmatprep.subr.bf16.mxu0 0
    %881 = vmatpush1.bf16.msra.mxu0 0
    %882 = vmatprep.subr.bf16.mxu0 0
    %883 = vmatpush1.bf16.msra.mxu0 0
    %884 = vmatprep.subr.bf16.mxu0 %v825
    %885 = vmatpush1.bf16.msra.mxu0 %v822
    %886 = vmatprep.subr.bf16.mxu0 %v797
    %887 = vmatpush1.bf16.msra.mxu0 %v794
    %888 = vmatprep.subr.bf16.mxu0 %v749
    %889 = vmatpush1.bf16.msra.mxu0 %v746
    %890 = vmatprep.subr.bf16.mxu0 0
    %891 = vmatpush2.bf16.msra.mxu0 0
    %892 = vmatprep.subr.bf16.mxu0 0
    %893 = vmatpush2.bf16.msra.mxu0 0
    %894 = vmatprep.subr.bf16.mxu0 0
    %895 = vmatpush2.bf16.msra.mxu0 0
    %896 = vmatprep.subr.bf16.mxu0 0
    %897 = vmatpush2.bf16.msra.mxu0 0
    %898 = vmatprep.subr.bf16.mxu0 0
    %899 = vmatpush2.bf16.msra.mxu0 0
    %900 = vmatprep.subr.bf16.mxu0 0
    %901 = vmatpush2.bf16.msra.mxu0 0
    %902 = vmatprep.subr.bf16.mxu0 0
    %903 = vmatpush2.bf16.msra.mxu0 0
    %904 = vmatprep.subr.bf16.mxu0 0
    %905 = vmatpush2.bf16.msra.mxu0 0
    %906 = vmatprep.mubr.bf16.mxu0 0
    %907 = vmatmul.mubr.bf16.gmra.mxu0 %v813
    %v908 = vpop.f32.mrf.mxu0
    %v909 = vadd.f32 %v810, %v908
    %v910 = vpop.f32.mrf.mxu0
    %v911 = vadd.f32 %v810, %v910
    %v912 = vpop.f32.mrf.mxu0
    %v913 = vpop.f32.mrf.mxu0
    %914 = vdwg.mxu0
    %915 = vmatprep.subr.bf16.mxu0 0
    %916 = vmatpush1.bf16.msra.mxu0 0
    %917 = vmatprep.subr.bf16.mxu0 0
    %918 = vmatpush1.bf16.msra.mxu0 0
    %919 = vmatprep.subr.bf16.mxu0 0
    %920 = vmatpush1.bf16.msra.mxu0 0
    %921 = vmatprep.subr.bf16.mxu0 0
    %922 = vmatpush1.bf16.msra.mxu0 0
    %923 = vmatprep.subr.bf16.mxu0 0
    %924 = vmatpush1.bf16.msra.mxu0 0
    %925 = vmatprep.subr.bf16.mxu0 %v831
    %926 = vmatpush1.bf16.msra.mxu0 %v828
    %927 = vmatprep.subr.bf16.mxu0 %v803
    %928 = vmatpush1.bf16.msra.mxu0 %v800
    %929 = vmatprep.subr.bf16.mxu0 %v755
    %930 = vmatpush1.bf16.msra.mxu0 %v752
    %931 = vmatprep.subr.bf16.mxu0 0
    %932 = vmatpush2.bf16.msra.mxu0 0
    %933 = vmatprep.subr.bf16.mxu0 0
    %934 = vmatpush2.bf16.msra.mxu0 0
    %935 = vmatprep.subr.bf16.mxu0 0
    %936 = vmatpush2.bf16.msra.mxu0 0
    %937 = vmatprep.subr.bf16.mxu0 0
    %938 = vmatpush2.bf16.msra.mxu0 0
    %939 = vmatprep.subr.bf16.mxu0 0
    %940 = vmatpush2.bf16.msra.mxu0 0
    %941 = vmatprep.subr.bf16.mxu0 0
    %942 = vmatpush2.bf16.msra.mxu0 0
    %943 = vmatprep.subr.bf16.mxu0 0
    %944 = vmatpush2.bf16.msra.mxu0 0
    %945 = vmatprep.subr.bf16.mxu0 0
    %946 = vmatpush2.bf16.msra.mxu0 0
    %947 = vmatprep.mubr.bf16.mxu0 0
    %948 = vmatmul.mubr.bf16.gmra.mxu0 %v813
    %v949 = vpop.f32.mrf.mxu0
    %v950 = vadd.f32 %v810, %v949
    %v951 = vpop.f32.mrf.mxu0
    %v952 = vadd.f32 %v810, %v951
    %v953 = vpop.f32.mrf.mxu0
    %v954 = vpop.f32.mrf.mxu0
    %955 = vdwg.mxu0
    %956 = vrot.lane.b32.xlu0 %v37, 109
    %v957 = vpop.permute.xlu0 %956
    %958 = vrot.lane.b32.xlu0 %v43, 109
    %v959 = vpop.permute.xlu0 %958
    %960 = vrot.lane.b32.xlu0 %v38, 109
    %v961 = vpop.permute.xlu0 %960
    %962 = vrot.lane.b32.xlu0 %v44, 109
    %v963 = vpop.permute.xlu0 %962
    %964 = vrot.lane.b32.xlu0 %v39, 109
    %v965 = vpop.permute.xlu0 %964
    %966 = vrot.lane.b32.xlu0 %v45, 109
    %v967 = vpop.permute.xlu0 %966
    %vm968 = vcmask 891904
    %v969 = vsel %vm968, %v957, %v959
    %v970 = vsel %vm968, %v959, %v961
    %v971 = vsel %vm968, %v961, %v963
    %v972 = vsel %vm968, %v963, %v965
    %v973 = vsel %vm968, %v965, %v967
    %v980 = vadd.f32 %v868, %v969
    %v981 = vadd.f32 %v870, %v970
    %v982 = vadd.f32 %v909, %v971
    %v983 = vadd.f32 %v911, %v972
    %v984 = vadd.f32 %v950, %v973
    %v985 = vadd.f32 %v952, %v967
    %v986 = vmax.f32 %v980, 0.0
    %v987 = vmax.f32 %v981, 0.0
    %v988 = vmax.f32 %v982, 0.0
    %v989 = vmax.f32 %v983, 0.0
    %v990 = vmax.f32 %v984, 0.0
    %v991 = vmax.f32 %v985, 0.0
    %v998 = vcombine.low %v986, %v987
    %v999 = vcombine.low %v988, %v989
    %v1000 = vcombine.low %v990, %v991
    %1004 = vst [vmem:[#allocation5] sm:$0xff] %v998
    %1005 = vst [vmem:[#allocation5 + $0x8] sm:$0xff] %v999
    %vm1006 = vcmask 687108
    %vm1007 = vmor %vm1006, %vm242
    %1008 = vst.msk [vmem:[#allocation5 + $0x10] sm:$0xff] %vm1007, %v1000
    // Predicated region
    $region30: #{tpu_custom_call.1} parent=1 // pred_check
      _
    $region31: #{tpu_custom_call.1} parent=1 // pred_check_branch
      %1010 = sbr.rel (0) target = $region33
    $region32: #{tpu_custom_call.1} parent=1 // pred_region
      %s1012 = ssub.s32 384, 384
      %1013 = vsyncadd [#allocation4], %s1012
      %s1015 = sshll.u32 [#allocation5], 4
      %s1016 = int_to_ptr.vmem [resolvable:$true] %s1015
      %1018 = dma.vmem_to_hbm [thread:$0]  %s1016, 384, %s6, [#allocation4]
    $region33: #{tpu_custom_call.1} parent=1 // pred_fallthru
      _
    // Predicated region
    $region34: #{tpu_custom_call.1} parent=1 // pred_check
      _
    $region35: #{tpu_custom_call.1} parent=1 // pred_check_branch
      %1020 = sbr.rel (0) target = $region37
    $region36: #{tpu_custom_call.1} parent=1 // pred_region
      %1021 = dma.done [#allocation4], 384
    $region37: #{tpu_custom_call.1} parent=1 // pred_fallthru
      _
    %1022 = vsyncpa [#allocation3], 1
    %1023 = vsyncpa [#allocation4], 1

</llo_original>
